<compile_context>
chip_gen: v5e
topology: v5e:2x2
jax: 0.10.0
libtpu: 0.0.40
codegen_flags: <defaults>
</compile_context>

<pallas_src>
import functools
import math

import jax
import jax.numpy as jnp
from jax.experimental import pallas as pl
from jax.experimental.pallas import tpu as pltpu

_LANE = 128
_SUBLANE = 8


def _round_up(x, m):
    return (x + m - 1) // m * m


def _fcnet_kernel(*refs, num_layers):
    """Fused h = relu(...relu(x @ W0 + b0)... @ W_{L-1} + b_{L-1}) on one M tile.

    refs = (x_ref, w0_ref, b0_ref, ..., w_{L-1}_ref, b_{L-1}_ref, o_ref)
      x_ref : [tile_m, in_dim]  f32  (un-padded; cast to bf16 here)
      w_ref : [K_l, N_l]        bf16 (per-layer padded, already [in, out])
      b_ref : [1,  N_l]         f32
      o_ref : [tile_m, out_dim] f32  (un-padded)
    """
    x_ref = refs[0]
    o_ref = refs[-1]
    h = x_ref[...].astype(jnp.bfloat16)
    for l in range(num_layers):                       # unrolled: L is small & static
        w_ref = refs[1 + 2 * l]
        b_ref = refs[2 + 2 * l]
        acc = jnp.dot(h, w_ref[...], preferred_element_type=jnp.float32)  # MXU
        acc = jnp.maximum(acc + b_ref[...], 0.0)      # f32 bias + ReLU (VPU)
        h = acc.astype(jnp.bfloat16) if l < num_layers - 1 else acc
    o_ref[...] = h.astype(o_ref.dtype)
    # TODO(synk): if a bundle dump ever shows vld/vst saturating from f32 spills
    # at tile_m>=1024, process the tile in 256-row sub-chunks with a VMEM scratch.


def _choose_tile_m(M, max_tile_m):
    """M tile: multiple of 256 (MXU-friendly), capped so grid>=2 when M is big
    enough (v7x has 2 TensorCores); tiny problems use a single full-M block."""
    if M <= 256:
        return M                                   # block dim == full dim: always legal
    return min(max_tile_m, _round_up(pl.cdiv(M, 2), 256))


def _fcnet_pallas(x, weights, biases, *, tile_m):
    """Launch the fused kernel over M tiles; weights/biases stay resident on-chip."""
    M, in_dim = x.shape
    L = len(weights)
    out_dim = weights[-1].shape[-1]

    in_specs = [pl.BlockSpec((tile_m, in_dim), lambda i: (i, 0))]   # x: tiled on M
    args = [x]
    for w, b in zip(weights, biases):
        # Constant index_map -> whole (small) weight/bias resident across the grid.
        # TODO(synk): once stacked weights reach a few MiB (matters first on v7x's
        # 64 MiB VMEM), single-buffer them via pipeline_mode=pl.Buffered(1) and/or
        # add an N (and K) grid axis with per-layer weight tiles.
        in_specs.append(pl.BlockSpec(w.shape, lambda i: (0, 0)))
        in_specs.append(pl.BlockSpec(b.shape, lambda i: (0, 0)))
        args += [w, b]

    flops = 2 * M * sum(w.shape[0] * w.shape[1] for w in weights)
    bytes_accessed = (
        x.size * x.dtype.itemsize
        + sum(w.size * w.dtype.itemsize for w in weights)
        + sum(b.size * b.dtype.itemsize for b in biases)
        + M * out_dim * 4
    )

    return pl.pallas_call(
        functools.partial(_fcnet_kernel, num_layers=L),
        out_shape=jax.ShapeDtypeStruct((M, out_dim), jnp.float32),
        grid=(pl.cdiv(M, tile_m),),
        in_specs=in_specs,
        out_specs=pl.BlockSpec((tile_m, out_dim), lambda i: (i, 0)),
        compiler_params=pltpu.CompilerParams(
            # M tiles are independent -> shard across both TCs on v7x.
            dimension_semantics=("parallel",),
        ),
        cost_estimate=pl.CostEstimate(
            flops=flops, transcendentals=0, bytes_accessed=bytes_accessed),
    )(*args)


def init_fcnet_params(key, dims):
    """Deterministic weight-norm parameters (v, g, b) per layer (PyTorch-style init)."""
    params = []
    for i in range(len(dims) - 1):
        in_dim, out_dim = dims[i], dims[i + 1]
        key, kv, kb = jax.random.split(key, 3)
        bound = 1.0 / math.sqrt(in_dim)
        v = jax.random.uniform(kv, (out_dim, in_dim), jnp.float32, -bound, bound)
        b = jax.random.uniform(kb, (out_dim,), jnp.float32, -bound, bound)
        g = jnp.linalg.norm(v)                  # weight_norm(dim=None) init: g = ||v||_F
        params.append({"v": v, "g": g, "b": b})
    return params


def prepare_fcnet_params(params):
    """One-time parameter prep (outside the forward hot path).

    Folds weight_norm(dim=None): W_eff = (g / ||v||_F) * v, transposes to
    [in, out], zero-pads each layer independently (layer 0 keeps true in_dim,
    the last layer keeps true out_dim, hidden dims round up to 128 lanes) and
    casts the weights to bf16.  Zero padding is exact through bias + ReLU.
    """
    L = len(params)
    weights, biases = [], []
    for l, p in enumerate(params):
        v, g, b = p["v"], p["g"], p["b"]
        out_d, in_d = v.shape
        w_eff = ((g / jnp.linalg.norm(v)) * v).T          # (in, out): kernel does x @ W
        k_pad = in_d if l == 0 else _round_up(in_d, _LANE)
        n_pad = out_d if l == L - 1 else _round_up(out_d, _LANE)
        w = jnp.zeros((k_pad, n_pad), jnp.bfloat16)
        w = w.at[:in_d, :out_d].set(w_eff.astype(jnp.bfloat16))
        bb = jnp.zeros((1, n_pad), jnp.float32).at[0, :out_d].set(b.astype(jnp.float32))
        weights.append(w)
        biases.append(bb)
    return tuple(weights), tuple(biases)


@functools.partial(jax.jit, static_argnames=("max_tile_m",))
def fcnet_forward(x, weights, biases, *, max_tile_m=1024):
    """FCNet forward: fused (weight-normed Linear -> ReLU) stack, all layers in
    one pallas_call; intermediates never touch HBM."""
    lead = x.shape[:-1]
    in_dim = x.shape[-1]
    out_dim = weights[-1].shape[-1]
    M = math.prod(lead) if lead else 1
    tile_m = _choose_tile_m(M, max_tile_m)
    out = _fcnet_pallas(x.reshape(M, in_dim), weights, biases, tile_m=tile_m)
    return out.reshape(lead + (out_dim,))


if __name__ == "__main__":
    key = jax.random.PRNGKey(0)
    dims = [32, 64, 32]                        # FCNet(dims=[32, 64, 32])
    batch, seq = 2, 8
    kx, kp = jax.random.split(key)
    x = jax.random.normal(kx, (batch, seq, dims[0]), jnp.float32)

    params = init_fcnet_params(kp, dims)
    weights, biases = prepare_fcnet_params(params)      # one-time prep

    out = fcnet_forward(x, weights, biases)
    jax.block_until_ready(out)

    # pure-JAX f32 reference of the original module
    ref = x.reshape(-1, dims[0])
    for p in params:
        w_eff = (p["g"] / jnp.linalg.norm(p["v"])) * p["v"]
        ref = jnp.maximum(ref @ w_eff.T + p["b"], 0.0)
    ref = ref.reshape(batch, seq, dims[-1])

    assert out.shape == (batch, seq, dims[-1])
    # Kernel feeds the MXU bf16 inputs (f32 accumulate) -> loosen vs the f32 ref.
    assert jnp.allclose(out, ref, atol=2e-2, rtol=2e-2), \
        float(jnp.max(jnp.abs(out - ref)))
    print("KERNEL_OK")
</pallas_src>

<mosaic_0001>
module attributes {stable_mosaic.version = 11 : i64} {
  func.func @_fcnet_kernel(%arg0: i32, %arg1: memref<16x32xf32, #tpu.memory_space<vmem>>, %arg2: memref<32x128xbf16, #tpu.memory_space<vmem>>, %arg3: memref<1x128xf32, #tpu.memory_space<vmem>>, %arg4: memref<128x32xbf16, #tpu.memory_space<vmem>>, %arg5: memref<1x32xf32, #tpu.memory_space<vmem>>, %arg6: memref<16x32xf32, #tpu.memory_space<vmem>>) attributes {dimension_semantics = [#tpu.dimension_semantics<parallel>], iteration_bounds = array<i64: 1>, scalar_prefetch = 0 : i64, scratch_operands = 0 : i64, tpu.core_type = #tpu.core_type<tc>, window_params = [{transform_indices = @transform_0, window_bounds = array<i64: 16, 32>}, {pipeline_mode = #tpu.pipeline_mode<synchronous>, transform_indices = @transform_1, window_bounds = array<i64: 32, 128>}, {pipeline_mode = #tpu.pipeline_mode<synchronous>, transform_indices = @transform_2, window_bounds = array<i64: 1, 128>}, {pipeline_mode = #tpu.pipeline_mode<synchronous>, transform_indices = @transform_3, window_bounds = array<i64: 128, 32>}, {pipeline_mode = #tpu.pipeline_mode<synchronous>, transform_indices = @transform_4, window_bounds = array<i64: 1, 32>}, {transform_indices = @transform_5, window_bounds = array<i64: 16, 32>}]} {
    %c0 = arith.constant 0 : index
    %c0_0 = arith.constant 0 : index
    %0 = vector.load %arg1[%c0, %c0_0] : memref<16x32xf32, #tpu.memory_space<vmem>>, vector<16x32xf32>
    %1 = arith.truncf %0 : vector<16x32xf32> to vector<16x32xbf16>
    %c0_1 = arith.constant 0 : index
    %c0_2 = arith.constant 0 : index
    %2 = vector.load %arg2[%c0_1, %c0_2] : memref<32x128xbf16, #tpu.memory_space<vmem>>, vector<32x128xbf16>
    %cst = arith.constant dense<0.000000e+00> : vector<16x128xf32>
    %3 = tpu.matmul %1, %2, %cst {dimension_numbers = #tpu.dot_dimension_numbers<[1], [0], [0], [1], [0, 0, 1, 1], [], []>} : vector<16x32xbf16>, vector<32x128xbf16>, vector<16x128xf32> -> vector<16x128xf32>
    %c0_3 = arith.constant 0 : index
    %c0_4 = arith.constant 0 : index
    %4 = vector.load %arg3[%c0_3, %c0_4] : memref<1x128xf32, #tpu.memory_space<vmem>>, vector<1x128xf32>
    %5 = vector.broadcast %4 : vector<1x128xf32> to vector<16x128xf32>
    %6 = arith.addf %3, %5 : vector<16x128xf32>
    %cst_5 = arith.constant 0.000000e+00 : f32
    %7 = vector.broadcast %cst_5 : f32 to vector<16x128xf32>
    %8 = arith.maximumf %6, %7 : vector<16x128xf32>
    %9 = arith.truncf %8 : vector<16x128xf32> to vector<16x128xbf16>
    %c0_6 = arith.constant 0 : index
    %c0_7 = arith.constant 0 : index
    %10 = vector.load %arg4[%c0_6, %c0_7] : memref<128x32xbf16, #tpu.memory_space<vmem>>, vector<128x32xbf16>
    %cst_8 = arith.constant dense<0.000000e+00> : vector<16x32xf32>
    %11 = tpu.matmul %9, %10, %cst_8 {dimension_numbers = #tpu.dot_dimension_numbers<[1], [0], [0], [1], [0, 0, 1, 1], [], []>} : vector<16x128xbf16>, vector<128x32xbf16>, vector<16x32xf32> -> vector<16x32xf32>
    %c0_9 = arith.constant 0 : index
    %c0_10 = arith.constant 0 : index
    %12 = vector.load %arg5[%c0_9, %c0_10] : memref<1x32xf32, #tpu.memory_space<vmem>>, vector<1x32xf32>
    %13 = vector.broadcast %12 : vector<1x32xf32> to vector<16x32xf32>
    %14 = arith.addf %11, %13 : vector<16x32xf32>
    %cst_11 = arith.constant 0.000000e+00 : f32
    %15 = vector.broadcast %cst_11 : f32 to vector<16x32xf32>
    %16 = arith.maximumf %14, %15 : vector<16x32xf32>
    %c0_12 = arith.constant 0 : index
    %c0_13 = arith.constant 0 : index
    %17 = vector.load %arg6[%c0_12, %c0_13] : memref<16x32xf32, #tpu.memory_space<vmem>>, vector<16x32xf32>
    tpu.vector_store %arg6[%c0_12, %c0_13], %16 {strides = array<i32>} : memref<16x32xf32, #tpu.memory_space<vmem>>, vector<16x32xf32>,
    return
  }
  func.func @transform_0(%arg0: i32) -> (i32, i32) {
    %c0_i32 = arith.constant 0 : i32
    %c0_i32_0 = arith.constant 0 : i32
    return %arg0, %c0_i32 : i32, i32
  }
  func.func @transform_1(%arg0: i32) -> (i32, i32) {
    %c0_i32 = arith.constant 0 : i32
    %c0_i32_0 = arith.constant 0 : i32
    %c0_i32_1 = arith.constant 0 : i32
    return %c0_i32, %c0_i32_0 : i32, i32
  }
  func.func @transform_2(%arg0: i32) -> (i32, i32) {
    %c0_i32 = arith.constant 0 : i32
    %c0_i32_0 = arith.constant 0 : i32
    %c0_i32_1 = arith.constant 0 : i32
    return %c0_i32, %c0_i32_0 : i32, i32
  }
  func.func @transform_3(%arg0: i32) -> (i32, i32) {
    %c0_i32 = arith.constant 0 : i32
    %c0_i32_0 = arith.constant 0 : i32
    %c0_i32_1 = arith.constant 0 : i32
    return %c0_i32, %c0_i32_0 : i32, i32
  }
  func.func @transform_4(%arg0: i32) -> (i32, i32) {
    %c0_i32 = arith.constant 0 : i32
    %c0_i32_0 = arith.constant 0 : i32
    %c0_i32_1 = arith.constant 0 : i32
    return %c0_i32, %c0_i32_0 : i32, i32
  }
  func.func @transform_5(%arg0: i32) -> (i32, i32) {
    %c0_i32 = arith.constant 0 : i32
    %c0_i32_0 = arith.constant 0 : i32
    return %arg0, %c0_i32 : i32, i32
  }
}

</mosaic_0001>

<llo_original>
// kernel: fcnet_forward.1
$region0: #{fcnet_forward.1}
  #allocation0 [shape = 'u32[]', space=smem, size = 0x4, offset = 0x4, fixed_abs, tag = 'smem constant byte address 0x4 - core index']
  #allocation1 [shape = 'u32[72,128]{1,0:T(1,128)}', space=vmem, size = 0x9000, scoped, tag = 'internal scratch']
  %s0 = inlined_call_operand.vmem [shape: f32[16,32], index: 0, kind: input, shape index: {}]
  %s1 = inlined_call_operand.vmem [shape: bf16[32,128], index: 1, kind: input, shape index: {}]
  %s2 = inlined_call_operand.vmem [shape: f32[1,128], index: 2, kind: input, shape index: {}]
  %s3 = inlined_call_operand.vmem [shape: bf16[128,32], index: 3, kind: input, shape index: {}]
  %s4 = inlined_call_operand.vmem [shape: f32[1,32], index: 4, kind: input, shape index: {}]
  %s5 = inlined_call_operand.hbm [shape: f32[16,32], index: 5, kind: output, shape index: {}]
  %s6 = sld [smem:[#allocation0]]
  $region30: #{fcnet_forward.1} parent=0
    _
  %s8 = ssub.s32 1, %s6
  %s9 = scalar_select 0, %s8, %s6
  $region1: #{fcnet_forward.1} parent=0
    #allocation2 [shape = 'u8[8192]{0}', space=vmem, size = 0x2000, scoped, tag = 'output window, operand 0, single buffered']
    #allocation3 [shape = 's32[1]{0}', space=sflag, size = 0x4, scoped, tag = 'scoped memory for fcnet_forward.1']
    %10 = vsyncpa [#allocation3], 0
    // Predicated region
    $region2: #{fcnet_forward.1} parent=1 // pred_check
      _
    $region3: #{fcnet_forward.1} parent=1 // pred_check_branch
      %12 = sbr.rel (0) target = $region5
    $region4: #{fcnet_forward.1} parent=1 // pred_region
      _
    $region5: #{fcnet_forward.1} parent=1 // pred_fallthru
      _
    // Predicated region
    $region6: #{fcnet_forward.1} parent=1 // pred_check
      _
    $region7: #{fcnet_forward.1} parent=1 // pred_check_branch
      %14 = sbr.rel (0) target = $region9
    $region8: #{fcnet_forward.1} parent=1 // pred_region
      _
    $region9: #{fcnet_forward.1} parent=1 // pred_fallthru
      _
    // Predicated region
    $region10: #{fcnet_forward.1} parent=1 // pred_check
      _
    $region11: #{fcnet_forward.1} parent=1 // pred_check_branch
      %16 = sbr.rel (0) target = $region13
    $region12: #{fcnet_forward.1} parent=1 // pred_region
      _
    $region13: #{fcnet_forward.1} parent=1 // pred_fallthru
      _
    // Predicated region
    $region14: #{fcnet_forward.1} parent=1 // pred_check
      _
    $region15: #{fcnet_forward.1} parent=1 // pred_check_branch
      %18 = sbr.rel (0) target = $region17
    $region16: #{fcnet_forward.1} parent=1 // pred_region
      _
    $region17: #{fcnet_forward.1} parent=1 // pred_fallthru
      _
    // Predicated region
    $region18: #{fcnet_forward.1} parent=1 // pred_check
      _
    $region19: #{fcnet_forward.1} parent=1 // pred_check_branch
      %20 = sbr.rel (0) target = $region21
    $region20: #{fcnet_forward.1} parent=1 // pred_region
      _
    $region21: #{fcnet_forward.1} parent=1 // pred_fallthru
      _
    %v22 = vld [vmem:[%s0] sm:$0xff]
    %v23 = vld [vmem:[%s0 + $0x8] sm:$0xff]
    %v24 = vpack.c.bf16 %v23, %v22
    %v25 = vld [vmem:[%s1] sm:$0xf]
    %v26 = vld [vmem:[%s1 + $0x4] sm:$0xf]
    %v27 = vld [vmem:[%s1 + $0x8] sm:$0xf]
    %v28 = vld [vmem:[%s1 + $0xc] sm:$0xf]
    %v29 = vld [vmem:[%s2] sm:$0x1]
    %v31 = vperm.slane %v29, 0
    %v37 = vunpack.c.l.b16 %v25
    %v38 = vunpack.c.l.b16 %v26
    %v39 = vunpack.c.l.b16 %v27
    %v40 = vunpack.c.l.b16 %v28
    %v41 = vpack.c.b16 %v38, %v37
    %v42 = vpack.c.b16 %v40, %v39
    %vm45 = vcmask 261120
    %v47 = vsel %vm45, %v24, 0
    %49 = vmatpush.bf16.msra.mxu0 0
    %50 = vmatpush.bf16.msra.mxu0 0
    %51 = vmatpush.bf16.msra.mxu0 0
    %52 = vmatpush.bf16.msra.mxu0 0
    %53 = vmatpush.bf16.msra.mxu0 0
    %54 = vmatpush.bf16.msra.mxu0 0
    %55 = vmatpush.bf16.msra.mxu0 %v42
    %56 = vmatpush.bf16.msra.mxu0 %v41
    %57 = vmatmul.bf16.gmra.mxu0 %v47
    %v58 = vpop.f32.mrf.mxu0
    %v59 = vadd.f32 %v31, %v58
    %v60 = vpop.f32.mrf.mxu0
    %v61 = vadd.f32 %v31, %v60
    %62 = vdwg.mxu0
    %v63 = vmax.f32 %v59, 0.0
    %v64 = vmax.f32 %v61, 0.0
    %v65 = vpack.c.bf16 %v64, %v63
    %v66 = vld [vmem:[%s3] sm:$0xf]
    %v67 = vld [vmem:[%s3 + $0x4] sm:$0xf]
    %v68 = vld [vmem:[%s3 + $0x8] sm:$0xf]
    %v69 = vld [vmem:[%s3 + $0xc] sm:$0xf]
    %v70 = vld [vmem:[%s3 + $0x10] sm:$0xf]
    %v71 = vld [vmem:[%s3 + $0x14] sm:$0xf]
    %v72 = vld [vmem:[%s3 + $0x18] sm:$0xf]
    %v73 = vld [vmem:[%s3 + $0x1c] sm:$0xf]
    %v74 = vld [vmem:[%s3 + $0x20] sm:$0xf]
    %v75 = vld [vmem:[%s3 + $0x24] sm:$0xf]
    %v76 = vld [vmem:[%s3 + $0x28] sm:$0xf]
    %v77 = vld [vmem:[%s3 + $0x2c] sm:$0xf]
    %v78 = vld [vmem:[%s3 + $0x30] sm:$0xf]
    %v79 = vld [vmem:[%s3 + $0x34] sm:$0xf]
    %v80 = vld [vmem:[%s3 + $0x38] sm:$0xf]
    %v81 = vld [vmem:[%s3 + $0x3c] sm:$0xf]
    %v82 = vld [vmem:[%s4] sm:$0x1]
    %v84 = vperm.slane %v82, 0
    %v102 = vunpack.c.l.b16 %v66
    %v103 = vunpack.c.l.b16 %v67
    %v104 = vunpack.c.l.b16 %v68
    %v105 = vunpack.c.l.b16 %v69
    %v106 = vunpack.c.l.b16 %v70
    %v107 = vunpack.c.l.b16 %v71
    %v108 = vunpack.c.l.b16 %v72
    %v109 = vunpack.c.l.b16 %v73
    %v110 = vunpack.c.l.b16 %v74
    %v111 = vunpack.c.l.b16 %v75
    %v112 = vunpack.c.l.b16 %v76
    %v113 = vunpack.c.l.b16 %v77
    %v114 = vunpack.c.l.b16 %v78
    %v115 = vunpack.c.l.b16 %v79
    %v116 = vunpack.c.l.b16 %v80
    %v117 = vunpack.c.l.b16 %v81
    %v118 = vpack.c.b16 %v103, %v102
    %v119 = vpack.c.b16 %v105, %v104
    %v120 = vpack.c.b16 %v107, %v106
    %v121 = vpack.c.b16 %v109, %v108
    %v122 = vpack.c.b16 %v111, %v110
    %v123 = vpack.c.b16 %v113, %v112
    %v124 = vpack.c.b16 %v115, %v114
    %v125 = vpack.c.b16 %v117, %v116
    %134 = vmatpush.bf16.msra.mxu0 %v125
    %135 = vmatpush.bf16.msra.mxu0 %v124
    %136 = vmatpush.bf16.msra.mxu0 %v123
    %137 = vmatpush.bf16.msra.mxu0 %v122
    %138 = vmatpush.bf16.msra.mxu0 %v121
    %139 = vmatpush.bf16.msra.mxu0 %v120
    %140 = vmatpush.bf16.msra.mxu0 %v119
    %141 = vmatpush.bf16.msra.mxu0 %v118
    %142 = vmatmul.bf16.gmra.mxu0 %v65
    %v143 = vpop.f32.mrf.mxu0
    %v144 = vadd.f32 %v84, %v143
    %v145 = vpop.f32.mrf.mxu0
    %v146 = vadd.f32 %v84, %v145
    %147 = vdwg.mxu0
    %v148 = vmax.f32 %v144, 0.0
    %v149 = vmax.f32 %v146, 0.0
    %150 = vst.msk [vmem:[#allocation2] sm:$0xff] %vm45, %v148
    %151 = vst.msk [vmem:[#allocation2 + $0x8] sm:$0xff] %vm45, %v149
    // Predicated region
    $region22: #{fcnet_forward.1} parent=1 // pred_check
      _
    $region23: #{fcnet_forward.1} parent=1 // pred_check_branch
      %153 = sbr.rel (0) target = $region25
    $region24: #{fcnet_forward.1} parent=1 // pred_region
      %155 = vsyncadd [#allocation3], 0
      %s156 = sshll.u32 [#allocation2], 4
      %s157 = int_to_ptr.vmem [resolvable:$true] %s156
      %s158 = sshll.u32 %s5, 4
      %s159 = int_to_ptr.hbm [resolvable:$true] %s158
      %164 = dma.vmem_to_hbm [thread:$0]  %s157, 256, %s159, [#allocation3], 128, 128, 8
    $region25: #{fcnet_forward.1} parent=1 // pred_fallthru
      _
    // Predicated region
    $region26: #{fcnet_forward.1} parent=1 // pred_check
      _
    $region27: #{fcnet_forward.1} parent=1 // pred_check_branch
      %166 = sbr.rel (0) target = $region29
    $region28: #{fcnet_forward.1} parent=1 // pred_region
      %168 = dma.done [#allocation3], 256
    $region29: #{fcnet_forward.1} parent=1 // pred_fallthru
      _
    %169 = vsyncpa [#allocation3], 1

</llo_original>
